<compile_context>
chip_gen: v7x
topology: tpu7x:2x2x1
jax: 0.10.0
libtpu: 0.0.40
codegen_flags: <defaults>
</compile_context>

<pallas_src>
import jax
import jax.numpy as jnp
from jax.experimental import pallas as pl
from jax.experimental.pallas import tpu as pltpu


def _score_row(x_ref, w1_ref, b1_ref, w2_ref, b2_ref):
    """Linear(E,16) -> ReLU -> Linear(16,1); returns scores as a (1, TILE_N) row."""
    # x: (TILE_N, E) f32, w1: (E, HID), b1: (1, HID), w2: (1, HID), b2: (1,1) in SMEM.
    h = jnp.dot(x_ref[...], w1_ref[...], preferred_element_type=jnp.float32)
    h = jnp.maximum(h + b1_ref[...], 0.0)  # ReLU; Dropout(p=0) is the identity
    # Transposed-RHS contraction over the HID (lane) axis: the score row is
    # produced directly in lane-major (1, TILE_N) layout.
    s = jnp.einsum("oh,nh->on", w2_ref[...], h,
                   preferred_element_type=jnp.float32)
    return s + b2_ref[0, 0]


def scores_kernel(x_ref, w1_ref, b1_ref, w2_ref, b2_ref, o_ref):
    o_ref[...] = _score_row(x_ref, w1_ref, b1_ref, w2_ref, b2_ref)


def fused_kernel(x_ref, w1_ref, b1_ref, w2_ref, b2_ref, o_ref):
    # Single-tile path: scores + softmax in one launch.
    s = _score_row(x_ref, w1_ref, b1_ref, w2_ref, b2_ref)
    m = jnp.max(s, axis=-1, keepdims=True)
    e = jnp.exp(s - m)
    o_ref[...] = e / jnp.sum(e, axis=-1, keepdims=True)


def softmax_kernel(s_ref, o_ref):
    # (1, N) lane-major softmax over the exact-length score row (no padding,
    # so no -inf masking is needed).
    s = s_ref[...]
    m = jnp.max(s, axis=-1, keepdims=True)
    e = jnp.exp(s - m)
    o_ref[...] = e / jnp.sum(e, axis=-1, keepdims=True)


def attention_layer(x, w1, b1, w2, b2, *, tile_n=512):
    """x: (N, E); w1: (E, 16); b1: (16,); w2: (16, 1); b2: (1,).
    Returns softmax over all N scores, shape (1, N) — matching
    torch.softmax(out.view(1, -1), dim=1)."""
    n, e = x.shape
    hid = w1.shape[1]
    b1 = jnp.reshape(b1, (1, hid)).astype(jnp.float32)
    w2_row = jnp.reshape(w2, (1, hid)).astype(jnp.float32)  # lane-major w2
    b2 = jnp.reshape(b2, (1, 1)).astype(jnp.float32)

    weight_specs = [
        pl.BlockSpec((e, hid), lambda i: (0, 0)),            # w1 (resident)
        pl.BlockSpec((1, hid), lambda i: (0, 0)),            # b1 (resident)
        pl.BlockSpec((1, hid), lambda i: (0, 0)),            # w2 row (resident)
        pl.BlockSpec(memory_space=pltpu.MemorySpace.SMEM),   # b2 scalar
    ]

    if n <= tile_n:
        return pl.pallas_call(
            fused_kernel,
            out_shape=jax.ShapeDtypeStruct((1, n), jnp.float32),
            grid=(1,),
            in_specs=[pl.BlockSpec((n, e), lambda i: (0, 0))] + weight_specs,
            out_specs=pl.BlockSpec((1, n), lambda i: (0, 0)),
        )(x, w1, b1, w2_row, b2)

    # Tiled two-pass path. tile_n is a multiple of 128 so the (1, tile_n)
    # output blocks are unmasked lane-dense stores; x tiles (tile_n, E) f32 are
    # double-buffered (2 * tile_n * E * 4 bytes), comfortably inside v7x's
    # 64 MiB VMEM for this layer's embedding sizes.
    tile_n = max(128, (tile_n // 128) * 128)
    scores = pl.pallas_call(
        scores_kernel,
        out_shape=jax.ShapeDtypeStruct((1, n), jnp.float32),
        grid=(pl.cdiv(n, tile_n),),
        in_specs=[pl.BlockSpec((tile_n, e), lambda i: (i, 0))] + weight_specs,
        out_specs=pl.BlockSpec((1, tile_n), lambda i: (0, i)),
        compiler_params=pltpu.CompilerParams(
            dimension_semantics=("parallel",)),
    )(x, w1, b1, w2_row, b2)

    # Tiny global softmax over the exact (1, N) score row.
    return pl.pallas_call(
        softmax_kernel,
        out_shape=jax.ShapeDtypeStruct((1, n), jnp.float32),
        grid=(1,),
        in_specs=[pl.BlockSpec((1, n), lambda i: (0, 0))],
        out_specs=pl.BlockSpec((1, n), lambda i: (0, 0)),
    )(scores)


def _reference(x, w1, b1, w2, b2):
    h = jnp.maximum(x @ w1 + b1, 0.0)
    s = (h @ w2 + b2).reshape(1, -1)
    return jax.nn.softmax(s, axis=1)


if __name__ == "__main__":
    E = 32    # embedding_size
    N = 256   # number of items attended over (2 tiles of 128 -> tiled path)
    HID = 16
    TILE_N = 128

    key = jax.random.PRNGKey(0)
    k_w1, k_w2, k_x = jax.random.split(key, 3)

    # Deterministic xavier_uniform-style init (matches nn.init.xavier_uniform_),
    # biases filled with 0.0 (init_weight).
    lim1 = (6.0 / (E + HID)) ** 0.5
    w1 = jax.random.uniform(k_w1, (E, HID), jnp.float32, -lim1, lim1)
    b1 = jnp.zeros((HID,), jnp.float32)

    lim2 = (6.0 / (HID + 1)) ** 0.5
    w2 = jax.random.uniform(k_w2, (HID, 1), jnp.float32, -lim2, lim2)
    b2 = jnp.zeros((1,), jnp.float32)

    x = jax.random.normal(k_x, (N, E), jnp.float32)

    # Tiled (multi-tile) path.
    out = attention_layer(x, w1, b1, w2, b2, tile_n=TILE_N)
    jax.block_until_ready(out)
    ref = _reference(x, w1, b1, w2, b2)
    assert out.shape == (1, N), out.shape
    assert jnp.allclose(out, ref, atol=1e-5, rtol=1e-5)
    assert jnp.allclose(jnp.sum(out), 1.0, atol=1e-5)

    # Single-tile fused path (toy size from the original test).
    x_small = x[:8]
    out_small = attention_layer(x_small, w1, b1, w2, b2, tile_n=TILE_N)
    jax.block_until_ready(out_small)
    ref_small = _reference(x_small, w1, b1, w2, b2)
    assert out_small.shape == (1, 8), out_small.shape
    assert jnp.allclose(out_small, ref_small, atol=1e-5, rtol=1e-5)
    assert jnp.allclose(jnp.sum(out_small), 1.0, atol=1e-5)

    print("KERNEL_OK")
</pallas_src>

<mosaic_0001>
module attributes {stable_mosaic.version = 11 : i64} {
  func.func @scores_kernel(%arg0: i32, %arg1: memref<128x32xf32, #tpu.memory_space<vmem>>, %arg2: memref<32x16xf32, #tpu.memory_space<vmem>>, %arg3: memref<1x16xf32, #tpu.memory_space<vmem>>, %arg4: memref<1x16xf32, #tpu.memory_space<vmem>>, %arg5: memref<1x1xf32, #tpu.memory_space<smem>>, %arg6: memref<1x128xf32, #tpu.memory_space<vmem>>) attributes {dimension_semantics = [#tpu.dimension_semantics<parallel>], iteration_bounds = array<i64: 2>, scalar_prefetch = 0 : i64, scratch_operands = 0 : i64, tpu.core_type = #tpu.core_type<tc>, window_params = [{transform_indices = @transform_0, window_bounds = array<i64: 128, 32>}, {pipeline_mode = #tpu.pipeline_mode<synchronous>, transform_indices = @transform_1, window_bounds = array<i64: 32, 16>}, {pipeline_mode = #tpu.pipeline_mode<synchronous>, transform_indices = @transform_2, window_bounds = array<i64: 1, 16>}, {pipeline_mode = #tpu.pipeline_mode<synchronous>, transform_indices = @transform_3, window_bounds = array<i64: 1, 16>}, {transform_indices = @transform_4, window_bounds = array<i64: 1, 1>}, {transform_indices = @transform_5, window_bounds = array<i64: 1, 128>}]} {
    %c0 = arith.constant 0 : index
    %c0_0 = arith.constant 0 : index
    %0 = vector.load %arg1[%c0, %c0_0] : memref<128x32xf32, #tpu.memory_space<vmem>>, vector<128x32xf32>
    %c0_1 = arith.constant 0 : index
    %c0_2 = arith.constant 0 : index
    %1 = vector.load %arg2[%c0_1, %c0_2] : memref<32x16xf32, #tpu.memory_space<vmem>>, vector<32x16xf32>
    %cst = arith.constant dense<0.000000e+00> : vector<128x16xf32>
    %2 = tpu.matmul %0, %1, %cst {dimension_numbers = #tpu.dot_dimension_numbers<[1], [0], [0], [1], [0, 0, 1, 1], [], []>} : vector<128x32xf32>, vector<32x16xf32>, vector<128x16xf32> -> vector<128x16xf32>
    %c0_3 = arith.constant 0 : index
    %c0_4 = arith.constant 0 : index
    %3 = vector.load %arg3[%c0_3, %c0_4] : memref<1x16xf32, #tpu.memory_space<vmem>>, vector<1x16xf32>
    %4 = vector.broadcast %3 : vector<1x16xf32> to vector<128x16xf32>
    %5 = arith.addf %2, %4 : vector<128x16xf32>
    %cst_5 = arith.constant 0.000000e+00 : f32
    %6 = vector.broadcast %cst_5 : f32 to vector<128x16xf32>
    %7 = arith.maximumf %5, %6 : vector<128x16xf32>
    %c0_6 = arith.constant 0 : index
    %c0_7 = arith.constant 0 : index
    %8 = vector.load %arg4[%c0_6, %c0_7] : memref<1x16xf32, #tpu.memory_space<vmem>>, vector<1x16xf32>
    "tpu.trace_start"() <{level = 10 : i32, message = "oh,nh->on"}> : () -> ()
    %cst_8 = arith.constant dense<0.000000e+00> : vector<1x128xf32>
    %9 = tpu.matmul %8, %7, %cst_8 {dimension_numbers = #tpu.dot_dimension_numbers<[1], [1], [0], [0], [0, 0, 1, 0], [], []>} : vector<1x16xf32>, vector<128x16xf32>, vector<1x128xf32> -> vector<1x128xf32>
    "tpu.trace_stop"() : () -> ()
    %c0_9 = arith.constant 0 : index
    %c0_10 = arith.constant 0 : index
    %10 = memref.load %arg5[%c0_9, %c0_10] : memref<1x1xf32, #tpu.memory_space<smem>>
    %11 = vector.broadcast %10 : f32 to vector<1x128xf32>
    %12 = arith.addf %9, %11 : vector<1x128xf32>
    %c0_11 = arith.constant 0 : index
    %c0_12 = arith.constant 0 : index
    %13 = vector.load %arg6[%c0_11, %c0_12] : memref<1x128xf32, #tpu.memory_space<vmem>>, vector<1x128xf32>
    tpu.vector_store %arg6[%c0_11, %c0_12], %12 {strides = array<i32>} : memref<1x128xf32, #tpu.memory_space<vmem>>, vector<1x128xf32>,
    return
  }
  func.func @transform_0(%arg0: i32) -> (i32, i32) {
    %c0_i32 = arith.constant 0 : i32
    %c0_i32_0 = arith.constant 0 : i32
    return %arg0, %c0_i32 : i32, i32
  }
  func.func @transform_1(%arg0: i32) -> (i32, i32) {
    %c0_i32 = arith.constant 0 : i32
    %c0_i32_0 = arith.constant 0 : i32
    %c0_i32_1 = arith.constant 0 : i32
    return %c0_i32, %c0_i32_0 : i32, i32
  }
  func.func @transform_2(%arg0: i32) -> (i32, i32) {
    %c0_i32 = arith.constant 0 : i32
    %c0_i32_0 = arith.constant 0 : i32
    %c0_i32_1 = arith.constant 0 : i32
    return %c0_i32, %c0_i32_0 : i32, i32
  }
  func.func @transform_3(%arg0: i32) -> (i32, i32) {
    %c0_i32 = arith.constant 0 : i32
    %c0_i32_0 = arith.constant 0 : i32
    %c0_i32_1 = arith.constant 0 : i32
    return %c0_i32, %c0_i32_0 : i32, i32
  }
  func.func @transform_4(%arg0: i32) -> (i32, i32) {
    %c0_i32 = arith.constant 0 : i32
    %c0_i32_0 = arith.constant 0 : i32
    %c0_i32_1 = arith.constant 0 : i32
    return %c0_i32, %c0_i32_0 : i32, i32
  }
  func.func @transform_5(%arg0: i32) -> (i32, i32) {
    %c0_i32 = arith.constant 0 : i32
    %c0_i32_0 = arith.constant 0 : i32
    return %c0_i32, %arg0 : i32, i32
  }
}

</mosaic_0001>

<llo_original>
// kernel: tpu_custom_call.1
$region0: #{tpu_custom_call.1}
  #allocation0 [shape = 'u32[]', space=smem, size = 0x4, offset = 0x4, fixed_abs, tag = 'smem constant byte address 0x4 - core index']
  #allocation1 [shape = 'u32[144,128]{1,0:T(1,128)}', space=vmem, size = 0x12000, scoped, tag = 'internal scratch']
  #allocation2 [shape = 'f32[1,1]{1,0:T(1,128)S(6)}', space=smem, size = 0x200, scoped, tag = 'scoped memory for tpu_custom_call.1']
  %s0 = inlined_call_operand.vmem [shape: f32[256,32], index: 0, kind: input, shape index: {}]
  %s1 = inlined_call_operand.vmem [shape: f32[32,16], index: 1, kind: input, shape index: {}]
  %s2 = inlined_call_operand.vmem [shape: f32[1,16], index: 2, kind: input, shape index: {}]
  %s3 = inlined_call_operand.vmem [shape: f32[1,16], index: 3, kind: input, shape index: {}]
  %s4 = inlined_call_operand.<no memory space> [shape: f32[1,1], index: 4, kind: input, shape index: {}]
  %s5 = inlined_call_operand.hbm [shape: f32[1,256], index: 5, kind: output, shape index: {}]
  %s6 = sld [smem:[#allocation0]]
  $region53: #{tpu_custom_call.1} parent=0
    _
  %s8 = ssub.s32 1, %s6
  %s9 = scalar_select 0, %s8, %s6
  %10 = sst [smem:[#allocation2]] %s4
  $region1: #{tpu_custom_call.1} parent=0
    #allocation3 [shape = 'u8[1024]{0}', space=vmem, size = 0x400, scoped, tag = 'output window, operand 0']
    #allocation4 [shape = 's32[2]{0}', space=sflag, size = 0x8, scoped, tag = 'scoped memory for tpu_custom_call.1']
    %11 = vsyncpa [#allocation4], 0
    %s12 = scalar_lea.sflag [#allocation4], 1
    %13 = vsyncpa %s12, 0
    loop: start=0, step=1, limit=4
    $region2: #{tpu_custom_call.1} parent=1 // loop_pre_header
      _
    $region3: #{tpu_custom_call.1} parent=1 // loop_header
      %s15 = sphi 0, %s19
      %p16 = scmp.ge.s32.totalorder %s15, 4
      %s25 = sphi 0, %s27
      %s28 = sphi 0, %s25
      %s29 = sphi 0, %s28
      %s45 = sphi 0, %s29
      %s49 = sphi 0, %s49
      %s51 = sphi 0, %s49
      %s52 = sphi 0, %s51
      %s66 = sphi 0, %s52
      %s70 = sphi 0, %s70
      %s72 = sphi 0, %s70
      %s73 = sphi 0, %s72
      %s87 = sphi 0, %s73
      %s91 = sphi 0, %s91
      %s93 = sphi 0, %s91
      %s94 = sphi 0, %s93
      %s108 = sphi 0, %s94
      %s112 = sphi 0, %s112
      %s114 = sphi 0, %s112
      %s115 = sphi 0, %s114
      %s129 = sphi 0, %s115
      %s135 = sphi 0, %s137
      %s138 = sphi 0, %s135
      %s139 = sphi 0, %s138
      %s155 = sphi 0, %s139
    $region4: #{tpu_custom_call.1} parent=1 // loop_header_branch
      %18 = sbr.rel (%p16) target = $region8
    $region5: #{tpu_custom_call.1} parent=1 // loop_body
      %s20 = ssub.s32 %s15, 1
      %s21 = ssub.s32 %s15, 2
      %s22 = sadd.s32 %s15, 1
      %s23 = ssub.s32 %s15, %s22
      %p24 = scmp.eq.s32.totalorder %s23, 0
      %s26 = sadd.s32 %s25, 1
      %s27 = scalar_select %p24, %s25, %s26
      %p30 = pneg %p24
      %p31 = scmp.eq.s32.totalorder %s15, 1
      %p32 = por %p30, %p31
      %p33 = scmp.ne.s32.totalorder %s25, %s28
      %p34 = scmp.eq.s32.totalorder %s15, 0
      %p35 = por %p33, %p34
      %p36 = scmp.ne.s32.totalorder %s25, %s28
      %p37 = scmp.eq.s32.totalorder %s20, 1
      %p38 = por %p36, %p37
      %p39 = scmp.ne.s32.totalorder %s28, %s29
      %p40 = scmp.eq.s32.totalorder %s20, 0
      %p41 = por %p39, %p40
      %p42 = scmp.ne.s32.totalorder %s28, %s29
      %p43 = scmp.eq.s32.totalorder %s21, 1
      %p44 = por %p42, %p43
      %p46 = scmp.ne.s32.totalorder %s29, %s45
      %p47 = scmp.eq.s32.totalorder %s21, 0
      %p48 = por %p46, %p47
      %s50 = sadd.s32 %s49, 1
      %p53 = scmp.eq.s32.totalorder %s15, 1
      %p54 = scmp.ne.s32.totalorder %s49, %s51
      %p55 = scmp.eq.s32.totalorder %s15, 0
      %p56 = por %p54, %p55
      %p57 = scmp.ne.s32.totalorder %s49, %s51
      %p58 = scmp.eq.s32.totalorder %s20, 1
      %p59 = por %p57, %p58
      %p60 = scmp.ne.s32.totalorder %s51, %s52
      %p61 = scmp.eq.s32.totalorder %s20, 0
      %p62 = por %p60, %p61
      %p63 = scmp.ne.s32.totalorder %s51, %s52
      %p64 = scmp.eq.s32.totalorder %s21, 1
      %p65 = por %p63, %p64
      %p67 = scmp.ne.s32.totalorder %s52, %s66
      %p68 = scmp.eq.s32.totalorder %s21, 0
      %p69 = por %p67, %p68
      %s71 = sadd.s32 %s70, 1
      %p74 = scmp.eq.s32.totalorder %s15, 1
      %p75 = scmp.ne.s32.totalorder %s70, %s72
      %p76 = scmp.eq.s32.totalorder %s15, 0
      %p77 = por %p75, %p76
      %p78 = scmp.ne.s32.totalorder %s70, %s72
      %p79 = scmp.eq.s32.totalorder %s20, 1
      %p80 = por %p78, %p79
      %p81 = scmp.ne.s32.totalorder %s72, %s73
      %p82 = scmp.eq.s32.totalorder %s20, 0
      %p83 = por %p81, %p82
      %p84 = scmp.ne.s32.totalorder %s72, %s73
      %p85 = scmp.eq.s32.totalorder %s21, 1
      %p86 = por %p84, %p85
      %p88 = scmp.ne.s32.totalorder %s73, %s87
      %p89 = scmp.eq.s32.totalorder %s21, 0
      %p90 = por %p88, %p89
      %s92 = sadd.s32 %s91, 1
      %p95 = scmp.eq.s32.totalorder %s15, 1
      %p96 = scmp.ne.s32.totalorder %s91, %s93
      %p97 = scmp.eq.s32.totalorder %s15, 0
      %p98 = por %p96, %p97
      %p99 = scmp.ne.s32.totalorder %s91, %s93
      %p100 = scmp.eq.s32.totalorder %s20, 1
      %p101 = por %p99, %p100
      %p102 = scmp.ne.s32.totalorder %s93, %s94
      %p103 = scmp.eq.s32.totalorder %s20, 0
      %p104 = por %p102, %p103
      %p105 = scmp.ne.s32.totalorder %s93, %s94
      %p106 = scmp.eq.s32.totalorder %s21, 1
      %p107 = por %p105, %p106
      %p109 = scmp.ne.s32.totalorder %s94, %s108
      %p110 = scmp.eq.s32.totalorder %s21, 0
      %p111 = por %p109, %p110
      %s113 = sadd.s32 %s112, 1
      %p116 = scmp.eq.s32.totalorder %s15, 1
      %p117 = scmp.ne.s32.totalorder %s112, %s114
      %p118 = scmp.eq.s32.totalorder %s15, 0
      %p119 = por %p117, %p118
      %p120 = scmp.ne.s32.totalorder %s112, %s114
      %p121 = scmp.eq.s32.totalorder %s20, 1
      %p122 = por %p120, %p121
      %p123 = scmp.ne.s32.totalorder %s114, %s115
      %p124 = scmp.eq.s32.totalorder %s20, 0
      %p125 = por %p123, %p124
      %p126 = scmp.ne.s32.totalorder %s114, %s115
      %p127 = scmp.eq.s32.totalorder %s21, 1
      %p128 = por %p126, %p127
      %p130 = scmp.ne.s32.totalorder %s115, %s129
      %p131 = scmp.eq.s32.totalorder %s21, 0
      %p132 = por %p130, %p131
      %s133 = ssub.s32 %s15, %s22
      %p134 = scmp.eq.s32.totalorder %s133, 0
      %s136 = sadd.s32 %s135, 1
      %s137 = scalar_select %p134, %s135, %s136
      %p140 = pneg %p134
      %p141 = scmp.eq.s32.totalorder %s15, 1
      %p142 = por %p140, %p141
      %p143 = scmp.ne.s32.totalorder %s135, %s138
      %p144 = scmp.eq.s32.totalorder %s15, 0
      %p145 = por %p143, %p144
      %p146 = scmp.ne.s32.totalorder %s135, %s138
      %p147 = scmp.eq.s32.totalorder %s20, 1
      %p148 = por %p146, %p147
      %p149 = scmp.ne.s32.totalorder %s138, %s139
      %p150 = scmp.eq.s32.totalorder %s20, 0
      %p151 = por %p149, %p150
      %p152 = scmp.ne.s32.totalorder %s138, %s139
      %p153 = scmp.eq.s32.totalorder %s21, 1
      %p154 = por %p152, %p153
      %p156 = scmp.ne.s32.totalorder %s139, %s155
      %p157 = scmp.eq.s32.totalorder %s21, 0
      %p158 = por %p156, %p157
      %p159 = scmp.le.s32.totalorder 1, %s15
      %p160 = scmp.lt.s32.totalorder %s15, 3
      %p161 = pnand %p159, %p160
      %p162 = pneg %p161
      // Predicated region
      $region9: #{tpu_custom_call.1} parent=5 // pred_check
        _
      $region10: #{tpu_custom_call.1} parent=5 // pred_check_branch
        %164 = sbr.rel (%p161) target = $region12
      $region11: #{tpu_custom_call.1} parent=5 // pred_region
        %s165 = ssub.s32 %s15, 1
        // Predicated region
        $region13: #{tpu_custom_call.1} parent=11 // pred_check
          %p166 = pneg %p62
        $region14: #{tpu_custom_call.1} parent=11 // pred_check_branch
          %168 = sbr.rel (%p166) target = $region16
        $region15: #{tpu_custom_call.1} parent=11 // pred_region
          _
        $region16: #{tpu_custom_call.1} parent=11 // pred_fallthru
          _
        // Predicated region
        $region17: #{tpu_custom_call.1} parent=11 // pred_check
          %p169 = pneg %p83
        $region18: #{tpu_custom_call.1} parent=11 // pred_check_branch
          %171 = sbr.rel (%p169) target = $region20
        $region19: #{tpu_custom_call.1} parent=11 // pred_region
          _
        $region20: #{tpu_custom_call.1} parent=11 // pred_fallthru
          _
        // Predicated region
        $region21: #{tpu_custom_call.1} parent=11 // pred_check
          %p172 = pneg %p104
        $region22: #{tpu_custom_call.1} parent=11 // pred_check_branch
          %174 = sbr.rel (%p172) target = $region24
        $region23: #{tpu_custom_call.1} parent=11 // pred_region
          _
        $region24: #{tpu_custom_call.1} parent=11 // pred_fallthru
          _
        // Predicated region
        $region25: #{tpu_custom_call.1} parent=11 // pred_check
          %p175 = pneg %p125
        $region26: #{tpu_custom_call.1} parent=11 // pred_check_branch
          %177 = sbr.rel (%p175) target = $region28
        $region27: #{tpu_custom_call.1} parent=11 // pred_region
          _
        $region28: #{tpu_custom_call.1} parent=11 // pred_fallthru
          _
      $region12: #{tpu_custom_call.1} parent=5 // pred_fallthru
        _
      %p178 = scmp.lt.s32.totalorder %s15, 2
      // Predicated region
      $region29: #{tpu_custom_call.1} parent=5 // pred_check
        %p179 = pneg %p178
      $region30: #{tpu_custom_call.1} parent=5 // pred_check_branch
        %181 = sbr.rel (%p179) target = $region32
      $region31: #{tpu_custom_call.1} parent=5 // pred_region
        // Predicated region
        $region33: #{tpu_custom_call.1} parent=31 // pred_check
          %p182 = pneg %p35
        $region34: #{tpu_custom_call.1} parent=31 // pred_check_branch
          %184 = sbr.rel (%p182) target = $region36
        $region35: #{tpu_custom_call.1} parent=31 // pred_region
          %s185 = smul.u32 16, %s15
          %p186 = scmp.lt.s32.totalorder %s185, 31
          %s187 = scalar_select %p186, %s185, 31
          %s188 = smul.addr %s187, 8
          %s189 = scalar_lea.vmem %s0, %s188
          %s190 = smul.u32 16, %s15
        $region36: #{tpu_custom_call.1} parent=31 // pred_fallthru
          _
      $region32: #{tpu_custom_call.1} parent=5 // pred_fallthru
        _
      %p191 = scmp.le.s32.totalorder 1, %s15
      %p192 = scmp.lt.s32.totalorder %s15, 3
      %p193 = pnand %p191, %p192
      %p194 = pneg %p193
      // Predicated region
      $region37: #{tpu_custom_call.1} parent=5 // pred_check
        _
      $region38: #{tpu_custom_call.1} parent=5 // pred_check_branch
        %196 = sbr.rel (%p193) target = $region40
      $region39: #{tpu_custom_call.1} parent=5 // pred_region
        %s197 = ssub.s32 %s15, 1
        %s198 = smul.u32 16, %s20
        %p199 = scmp.lt.s32.totalorder %s198, 31
        %s200 = scalar_select %p199, %s198, 31
        %s201 = smul.addr %s200, 8
        %s202 = scalar_lea.vmem %s0, %s201
        %p203 = pneg %p41
        %p204 = pneg %p38
        %p205 = pneg %p62
        %p206 = pneg %p59
        %p207 = pneg %p83
        %p208 = pneg %p80
        %p209 = pneg %p104
        %p210 = pneg %p101
        %p211 = pneg %p125
        %p212 = pneg %p122
        %p213 = pneg %p151
        %p214 = pneg %p148
        %s215 = sand.u32 %s138, 1
        %s216 = scalar_lea.sflag [#allocation4], %s215
        %s217 = sand.u32 %s138, 1
        %s218 = scalar_lea.vmem [#allocation3], %s217
        %s219 = smul.u32 16, %s20
        %p220 = scmp.lt.s32.totalorder %s219, 31
        %s221 = scalar_select %p220, %s219, 31
        %s222 = smul.addr %s221, 8
        %s223 = scalar_lea.vmem %s0, %s222
        %s224 = smul.u32 16, %s20
        %v225 = vld [vmem:[%s223] sm:$0xff]
        %v226 = vld [vmem:[%s223 + $0x8] sm:$0xff]
        %v227 = vld [vmem:[%s223 + $0x10] sm:$0xff]
        %v228 = vld [vmem:[%s223 + $0x18] sm:$0xff]
        %v229 = vld [vmem:[%s223 + $0x20] sm:$0xff]
        %v230 = vld [vmem:[%s223 + $0x28] sm:$0xff]
        %v231 = vld [vmem:[%s223 + $0x30] sm:$0xff]
        %v232 = vld [vmem:[%s223 + $0x38] sm:$0xff]
        %v233 = vld [vmem:[%s223 + $0x40] sm:$0xff]
        %v234 = vld [vmem:[%s223 + $0x48] sm:$0xff]
        %v235 = vld [vmem:[%s223 + $0x50] sm:$0xff]
        %v236 = vld [vmem:[%s223 + $0x58] sm:$0xff]
        %v237 = vld [vmem:[%s223 + $0x60] sm:$0xff]
        %v238 = vld [vmem:[%s223 + $0x68] sm:$0xff]
        %v239 = vld [vmem:[%s223 + $0x70] sm:$0xff]
        %v240 = vld [vmem:[%s223 + $0x78] sm:$0xff]
        %v241 = vld [vmem:[%s1] sm:$0xff]
        %v242 = vld [vmem:[%s1 + $0x8] sm:$0xff]
        %v243 = vld [vmem:[%s1 + $0x10] sm:$0xff]
        %v244 = vld [vmem:[%s1 + $0x18] sm:$0xff]
        %v245 = vld [vmem:[%s2] sm:$0x1]
        %v247 = vlaneseq
        %v248 = vshrl.u32 %v247, 7
        %v249 = vsub.s32 0, %v248
        %v250 = vrot.slane %v245, %v249
        %vm252 = vcmask 261120
        %v254 = vsel %vm252, %v225, 0
        %v257 = vsel %vm252, %v226, 0
        %v260 = vsel %vm252, %v227, 0
        %v263 = vsel %vm252, %v228, 0
        %v266 = vsel %vm252, %v229, 0
        %v269 = vsel %vm252, %v230, 0
        %v272 = vsel %vm252, %v231, 0
        %v275 = vsel %vm252, %v232, 0
        %v278 = vsel %vm252, %v233, 0
        %v281 = vsel %vm252, %v234, 0
        %v284 = vsel %vm252, %v235, 0
        %v287 = vsel %vm252, %v236, 0
        %v290 = vsel %vm252, %v237, 0
        %v293 = vsel %vm252, %v238, 0
        %v296 = vsel %vm252, %v239, 0
        %v299 = vsel %vm252, %v240, 0
        %301 = vmatprep.subr.mxu0 0.0
        %302 = vmatpush1.msra.mxu0 %v241
        %303 = vmatprep.subr.mxu0 0.0
        %304 = vmatpush1.msra.mxu0 %v242
        %305 = vmatprep.subr.mxu0 0.0
        %306 = vmatpush1.msra.mxu0 %v243
        %307 = vmatprep.subr.mxu0 0.0
        %308 = vmatpush1.msra.mxu0 %v244
        %309 = vmatprep.subr.mxu0 0.0
        %310 = vmatpush1.msra.mxu0 0.0
        %311 = vmatprep.subr.mxu0 0.0
        %312 = vmatpush1.msra.mxu0 0.0
        %313 = vmatprep.subr.mxu0 0.0
        %314 = vmatpush1.msra.mxu0 0.0
        %315 = vmatprep.subr.mxu0 0.0
        %316 = vmatpush1.msra.mxu0 0.0
        %317 = vmatprep.subr.mxu0 0.0
        %318 = vmatpush1.msra.mxu0 0.0
        %319 = vmatprep.subr.mxu0 0.0
        %320 = vmatpush1.msra.mxu0 0.0
        %321 = vmatprep.subr.mxu0 0.0
        %322 = vmatpush1.msra.mxu0 0.0
        %323 = vmatprep.subr.mxu0 0.0
        %324 = vmatpush1.msra.mxu0 0.0
        %325 = vmatprep.subr.mxu0 0.0
        %326 = vmatpush1.msra.mxu0 0.0
        %327 = vmatprep.subr.mxu0 0.0
        %328 = vmatpush1.msra.mxu0 0.0
        %329 = vmatprep.subr.mxu0 0.0
        %330 = vmatpush1.msra.mxu0 0.0
        %331 = vmatprep.subr.mxu0 0.0
        %332 = vmatpush1.msra.mxu0 0.0
        %333 = vmatprep.subr.mxu0 0.0
        %334 = vmatpush1.msra.mxu0 0.0
        %335 = vmatprep.subr.mxu0 0.0
        %336 = vmatpush1.msra.mxu0 0.0
        %337 = vmatprep.subr.mxu0 0.0
        %338 = vmatpush1.msra.mxu0 0.0
        %339 = vmatprep.subr.mxu0 0.0
        %340 = vmatpush1.msra.mxu0 0.0
        %341 = vmatprep.subr.mxu0 0.0
        %342 = vmatpush1.msra.mxu0 0.0
        %343 = vmatprep.subr.mxu0 0.0
        %344 = vmatpush1.msra.mxu0 0.0
        %345 = vmatprep.subr.mxu0 0.0
        %346 = vmatpush1.msra.mxu0 0.0
        %347 = vmatprep.subr.mxu0 0.0
        %348 = vmatpush1.msra.mxu0 0.0
        %349 = vmatprep.subr.mxu0 0.0
        %350 = vmatpush1.msra.mxu0 0.0
        %351 = vmatprep.subr.mxu0 0.0
        %352 = vmatpush1.msra.mxu0 0.0
        %353 = vmatprep.subr.mxu0 0.0
        %354 = vmatpush1.msra.mxu0 0.0
        %355 = vmatprep.subr.mxu0 0.0
        %356 = vmatpush1.msra.mxu0 0.0
        %357 = vmatprep.subr.mxu0 0.0
        %358 = vmatpush1.msra.mxu0 0.0
        %359 = vmatprep.subr.mxu0 0.0
        %360 = vmatpush1.msra.mxu0 0.0
        %361 = vmatprep.subr.mxu0 0.0
        %362 = vmatpush1.msra.mxu0 0.0
        %363 = vmatprep.subr.mxu0 0.0
        %364 = vmatpush1.msra.mxu0 0.0
        %365 = vmatprep.mubr.f32.mxu0 0.0
        %366 = vmatmul.mubr.f32.gmra.mrb[0].mxu0 %v254
        %v367 = vpop.f32.mrb[0].mxu0
        %v368 = vadd.f32 %v250, %v367
        %v369 = vpop.f32.mrb[0].mxu0
        %370 = vmatprep.mubr.f32.mxu0 0.0
        %371 = vmatmul.mubr.f32.gmra.mrb[0].mxu0 %v257
        %v372 = vpop.f32.mrb[0].mxu0
        %v373 = vadd.f32 %v250, %v372
        %v374 = vpop.f32.mrb[0].mxu0
        %375 = vmatprep.mubr.f32.mxu0 0.0
        %376 = vmatmul.mubr.f32.gmra.mrb[0].mxu0 %v260
        %v377 = vpop.f32.mrb[0].mxu0
        %v378 = vadd.f32 %v250, %v377
        %v379 = vpop.f32.mrb[0].mxu0
        %380 = vmatprep.mubr.f32.mxu0 0.0
        %381 = vmatmul.mubr.f32.gmra.mrb[0].mxu0 %v263
        %v382 = vpop.f32.mrb[0].mxu0
        %v383 = vadd.f32 %v250, %v382
        %v384 = vpop.f32.mrb[0].mxu0
        %385 = vmatprep.mubr.f32.mxu0 0.0
        %386 = vmatmul.mubr.f32.gmra.mrb[0].mxu0 %v266
        %v387 = vpop.f32.mrb[0].mxu0
        %v388 = vadd.f32 %v250, %v387
        %v389 = vpop.f32.mrb[0].mxu0
        %390 = vmatprep.mubr.f32.mxu0 0.0
        %391 = vmatmul.mubr.f32.gmra.mrb[0].mxu0 %v269
        %v392 = vpop.f32.mrb[0].mxu0
        %v393 = vadd.f32 %v250, %v392
        %v394 = vpop.f32.mrb[0].mxu0
        %395 = vmatprep.mubr.f32.mxu0 0.0
        %396 = vmatmul.mubr.f32.gmra.mrb[0].mxu0 %v272
        %v397 = vpop.f32.mrb[0].mxu0
        %v398 = vadd.f32 %v250, %v397
        %v399 = vpop.f32.mrb[0].mxu0
        %400 = vmatprep.mubr.f32.mxu0 0.0
        %401 = vmatmul.mubr.f32.gmra.mrb[0].mxu0 %v275
        %v402 = vpop.f32.mrb[0].mxu0
        %v403 = vadd.f32 %v250, %v402
        %v404 = vpop.f32.mrb[0].mxu0
        %405 = vmatprep.mubr.f32.mxu0 0.0
        %406 = vmatmul.mubr.f32.gmra.mrb[0].mxu0 %v278
        %v407 = vpop.f32.mrb[0].mxu0
        %v408 = vadd.f32 %v250, %v407
        %v409 = vpop.f32.mrb[0].mxu0
        %410 = vmatprep.mubr.f32.mxu0 0.0
        %411 = vmatmul.mubr.f32.gmra.mrb[0].mxu0 %v281
        %v412 = vpop.f32.mrb[0].mxu0
        %v413 = vadd.f32 %v250, %v412
        %v414 = vpop.f32.mrb[0].mxu0
        %415 = vmatprep.mubr.f32.mxu0 0.0
        %416 = vmatmul.mubr.f32.gmra.mrb[0].mxu0 %v284
        %v417 = vpop.f32.mrb[0].mxu0
        %v418 = vadd.f32 %v250, %v417
        %v419 = vpop.f32.mrb[0].mxu0
        %420 = vmatprep.mubr.f32.mxu0 0.0
        %421 = vmatmul.mubr.f32.gmra.mrb[0].mxu0 %v287
        %v422 = vpop.f32.mrb[0].mxu0
        %v423 = vadd.f32 %v250, %v422
        %v424 = vpop.f32.mrb[0].mxu0
        %425 = vmatprep.mubr.f32.mxu0 0.0
        %426 = vmatmul.mubr.f32.gmra.mrb[0].mxu0 %v290
        %v427 = vpop.f32.mrb[0].mxu0
        %v428 = vadd.f32 %v250, %v427
        %v429 = vpop.f32.mrb[0].mxu0
        %430 = vmatprep.mubr.f32.mxu0 0.0
        %431 = vmatmul.mubr.f32.gmra.mrb[0].mxu0 %v293
        %v432 = vpop.f32.mrb[0].mxu0
        %v433 = vadd.f32 %v250, %v432
        %v434 = vpop.f32.mrb[0].mxu0
        %435 = vmatprep.mubr.f32.mxu0 0.0
        %436 = vmatmul.mubr.f32.gmra.mrb[0].mxu0 %v296
        %v437 = vpop.f32.mrb[0].mxu0
        %v438 = vadd.f32 %v250, %v437
        %v439 = vpop.f32.mrb[0].mxu0
        %440 = vmatprep.mubr.f32.mxu0 0.0
        %441 = vmatmul.mubr.f32.gmra.mrb[0].mxu0 %v299
        %v442 = vpop.f32.mrb[0].mxu0
        %v443 = vadd.f32 %v250, %v442
        %v444 = vpop.f32.mrb[0].mxu0
        %445 = vdwg.mxu0
        %v446 = vmax.f32 %v368, 0.0
        %v447 = vmax.f32 %v373, 0.0
        %v448 = vmax.f32 %v378, 0.0
        %v449 = vmax.f32 %v383, 0.0
        %v450 = vmax.f32 %v388, 0.0
        %v451 = vmax.f32 %v393, 0.0
        %v452 = vmax.f32 %v398, 0.0
        %v453 = vmax.f32 %v403, 0.0
        %v454 = vmax.f32 %v408, 0.0
        %v455 = vmax.f32 %v413, 0.0
        %v456 = vmax.f32 %v418, 0.0
        %v457 = vmax.f32 %v423, 0.0
        %v458 = vmax.f32 %v428, 0.0
        %v459 = vmax.f32 %v433, 0.0
        %v460 = vmax.f32 %v438, 0.0
        %v461 = vmax.f32 %v443, 0.0
        %v462 = vld [vmem:[%s3] sm:$0x1]
        %s463 = sld [smem:[#allocation2]]
        %v464 = vstv %s463
        %vm465 = vcmask 130048
        %v467 = vsel %vm465, %v462, 0
        %v470 = vsel %vm465, %v446, 0
        %v473 = vsel %vm465, %v447, 0
        %v476 = vsel %vm465, %v448, 0
        %v479 = vsel %vm465, %v449, 0
        %v482 = vsel %vm465, %v450, 0
        %v485 = vsel %vm465, %v451, 0
        %v488 = vsel %vm465, %v452, 0
        %v491 = vsel %vm465, %v453, 0
        %v494 = vsel %vm465, %v454, 0
        %v497 = vsel %vm465, %v455, 0
        %v500 = vsel %vm465, %v456, 0
        %v503 = vsel %vm465, %v457, 0
        %v506 = vsel %vm465, %v458, 0
        %v509 = vsel %vm465, %v459, 0
        %v512 = vsel %vm465, %v460, 0
        %v515 = vsel %vm465, %v461, 0
        %517 = vmatprep.subr.mxu0 0.0
        %518 = vmatpush1.xpose.msra.mxu0 %v470
        %519 = vmatprep.subr.mxu0 0.0
        %520 = vmatpush1.xpose.msra.mxu0 %v473
        %521 = vmatprep.subr.mxu0 0.0
        %522 = vmatpush1.xpose.msra.mxu0 %v476
        %523 = vmatprep.subr.mxu0 0.0
        %524 = vmatpush1.xpose.msra.mxu0 %v479
        %525 = vmatprep.subr.mxu0 0.0
        %526 = vmatpush1.xpose.msra.mxu0 %v482
        %527 = vmatprep.subr.mxu0 0.0
        %528 = vmatpush1.xpose.msra.mxu0 %v485
        %529 = vmatprep.subr.mxu0 0.0
        %530 = vmatpush1.xpose.msra.mxu0 %v488
        %531 = vmatprep.subr.mxu0 0.0
        %532 = vmatpush1.xpose.msra.mxu0 %v491
        %533 = vmatprep.subr.mxu0 0.0
        %534 = vmatpush1.xpose.msra.mxu0 %v494
        %535 = vmatprep.subr.mxu0 0.0
        %536 = vmatpush1.xpose.msra.mxu0 %v497
        %537 = vmatprep.subr.mxu0 0.0
        %538 = vmatpush1.xpose.msra.mxu0 %v500
        %539 = vmatprep.subr.mxu0 0.0
        %540 = vmatpush1.xpose.msra.mxu0 %v503
        %541 = vmatprep.subr.mxu0 0.0
        %542 = vmatpush1.xpose.msra.mxu0 %v506
        %543 = vmatprep.subr.mxu0 0.0
        %544 = vmatpush1.xpose.msra.mxu0 %v509
        %545 = vmatprep.subr.mxu0 0.0
        %546 = vmatpush1.xpose.msra.mxu0 %v512
        %547 = vmatprep.subr.mxu0 0.0
        %548 = vmatpush1.xpose.msra.mxu0 %v515
        %549 = vmatprep.subr.mxu0 0.0
        %550 = vmatpush1.xpose.msra.mxu0 0.0
        %551 = vmatprep.subr.mxu0 0.0
        %552 = vmatpush1.xpose.msra.mxu0 0.0
        %553 = vmatprep.subr.mxu0 0.0
        %554 = vmatpush1.xpose.msra.mxu0 0.0
        %555 = vmatprep.subr.mxu0 0.0
        %556 = vmatpush1.xpose.msra.mxu0 0.0
        %557 = vmatprep.subr.mxu0 0.0
        %558 = vmatpush1.xpose.msra.mxu0 0.0
        %559 = vmatprep.subr.mxu0 0.0
        %560 = vmatpush1.xpose.msra.mxu0 0.0
        %561 = vmatprep.subr.mxu0 0.0
        %562 = vmatpush1.xpose.msra.mxu0 0.0
        %563 = vmatprep.subr.mxu0 0.0
        %564 = vmatpush1.xpose.msra.mxu0 0.0
        %565 = vmatprep.subr.mxu0 0.0
        %566 = vmatpush1.xpose.msra.mxu0 0.0
        %567 = vmatprep.subr.mxu0 0.0
        %568 = vmatpush1.xpose.msra.mxu0 0.0
        %569 = vmatprep.subr.mxu0 0.0
        %570 = vmatpush1.xpose.msra.mxu0 0.0
        %571 = vmatprep.subr.mxu0 0.0
        %572 = vmatpush1.xpose.msra.mxu0 0.0
        %573 = vmatprep.subr.mxu0 0.0
        %574 = vmatpush1.xpose.msra.mxu0 0.0
        %575 = vmatprep.subr.mxu0 0.0
        %576 = vmatpush1.xpose.msra.mxu0 0.0
        %577 = vmatprep.subr.mxu0 0.0
        %578 = vmatpush1.xpose.msra.mxu0 0.0
        %579 = vmatprep.subr.mxu0 0.0
        %580 = vmatpush1.xpose.msra.mxu0 0.0
        %581 = vmatprep.mubr.f32.mxu0 0.0
        %582 = vmatmul.mubr.f32.gmra.mrb[0].mxu0 %v467
        %v583 = vpop.f32.mrb[0].mxu0
        %v584 = vadd.f32 %v464, %v583
        %v585 = vpop.f32.mrb[0].mxu0
        %586 = vdwg.mxu0
        %587 = vst [vmem:[%s218] sm:$0x1] %v584
        %s588 = sand.u32 %s138, 1
        %s589 = scalar_lea.sflag [#allocation4], %s588
        %s590 = sand.u32 %s138, 1
        %s591 = scalar_lea.vmem [#allocation3], %s590
        // Predicated region
        $region41: #{tpu_custom_call.1} parent=39 // pred_check
          %p592 = pneg %p148
        $region42: #{tpu_custom_call.1} parent=39 // pred_check_branch
          %594 = sbr.rel (%p592) target = $region44
        $region43: #{tpu_custom_call.1} parent=39 // pred_region
          %s596 = ssub.s32 16, 16
          %597 = vsyncadd %s589, %s596
          %s598 = smul.addr %s20, 16
          %s599 = scalar_lea.hbm %s5, %s598
          %s601 = sshll.u32 %s591, 4
          %s602 = int_to_ptr.vmem [resolvable:$true] %s601
          %604 = dma.vmem_to_hbm [thread:$0]  %s602, 16, %s599, %s589
        $region44: #{tpu_custom_call.1} parent=39 // pred_fallthru
          _
      $region40: #{tpu_custom_call.1} parent=5 // pred_fallthru
        _
      %p605 = scmp.le.s32.totalorder 2, %s15
      // Predicated region
      $region45: #{tpu_custom_call.1} parent=5 // pred_check
        %p606 = pneg %p605
      $region46: #{tpu_custom_call.1} parent=5 // pred_check_branch
        %608 = sbr.rel (%p606) target = $region48
      $region47: #{tpu_custom_call.1} parent=5 // pred_region
        %s609 = ssub.s32 %s15, 2
        // Predicated region
        $region49: #{tpu_custom_call.1} parent=47 // pred_check
          %p610 = pneg %p154
        $region50: #{tpu_custom_call.1} parent=47 // pred_check_branch
          %612 = sbr.rel (%p610) target = $region52
        $region51: #{tpu_custom_call.1} parent=47 // pred_region
          %s613 = sand.u32 %s139, 1
          %s614 = scalar_lea.sflag [#allocation4], %s613
          %s615 = sand.u32 %s139, 1
          %s616 = scalar_lea.vmem [#allocation3], %s615
          %617 = dma.done %s614, 16
        $region52: #{tpu_custom_call.1} parent=47 // pred_fallthru
          _
      $region48: #{tpu_custom_call.1} parent=5 // pred_fallthru
        _
    $region6: #{tpu_custom_call.1} parent=1 // loop_footer
      %s19 = sadd.s32 1, %s15
    $region7: #{tpu_custom_call.1} parent=1 // loop_footer_branch
      %14 = sbr.rel target = $region3
    $region8: #{tpu_custom_call.1} parent=1 // loop_exit
      _
    %618 = vsyncpa [#allocation4], 1
    %s619 = scalar_lea.sflag [#allocation4], 1
    %620 = vsyncpa %s619, 1

</llo_original>
